<compile_context>
chip_gen: v6e
topology: v6e:2x2x1
jax: 0.10.0
libtpu: 0.0.40
codegen_flags: <defaults>
</compile_context>

<pallas_src>
import functools

import jax
import jax.numpy as jnp
from jax.experimental import pallas as pl
from jax.experimental.pallas import tpu as pltpu


IN_DIM = 24
HID_DIM = 200
PAD_HID = 256  # zero-padded hidden width (full MXU tile)


def _round_up(n, m):
    return ((n + m - 1) // m) * m


def mlp_kernel(xT_ref, w1T_ref, b1_ref, w2T_ref, b2_ref, w3_ref, b3_ref, o_ref):
    # fc1 + ReLU:  (256, 24)bf16 @ (24, tile)bf16 -> (256, tile)f32
    h1 = jnp.dot(w1T_ref[...], xT_ref[...], preferred_element_type=jnp.float32)
    h1 = jnp.maximum(h1 + b1_ref[...], 0.0)

    # Dropout(0.5): identity in eval/inference mode.
    # TODO(synk): training-mode dropout (random mask + 2x scaling) not emitted.

    # fc2 + ReLU:  (256, 256)bf16 @ (256, tile)bf16 -> (256, tile)f32
    h2 = jnp.dot(w2T_ref[...], h1.astype(jnp.bfloat16),
                 preferred_element_type=jnp.float32)
    h2 = jnp.maximum(h2 + b2_ref[...], 0.0)

    # fc3 (out_features == 1): f32 VPU multiply + sublane reduction -> (1, tile)
    # lane-dense row; b3 is an SMEM scalar.
    z = jnp.sum(h2 * w3_ref[...], axis=0, keepdims=True) + b3_ref[0, 0]
    o_ref[...] = jax.nn.sigmoid(z)


@functools.partial(jax.jit, static_argnames=("tile_b",))
def net_forward(x, padded_params, tile_b=2048):
    """x: (B, 24) float32 -> (B, 1) float32.

    padded_params (transposed / padded / bf16 where fed to the MXU):
      w1T (256, 24) bf16, b1 (256, 1) f32, w2T (256, 256) bf16, b2 (256, 1) f32,
      w3  (256, 1)  f32,  b3 (1, 1)    f32.
    """
    w1T, b1, w2T, b2, w3, b3 = padded_params
    B = x.shape[0]

    # Batch tile: multiple of 128 (lane-dense), >=2 grid steps for B > 128 so
    # the "parallel" batch axis shards across the two v7x TensorCores, capped
    # at 4096 to stay well inside v7x's 64 MiB VMEM.
    tile_b = min(4096, _round_up(max(int(tile_b), 128), 128))
    tile = min(tile_b, _round_up(pl.cdiv(B, 2), 128))
    b_pad = _round_up(B, tile)
    grid = (b_pad // tile,)

    # Feature-major (transposed) bf16 input slab: (24, b_pad).
    xT = jnp.pad(x.astype(jnp.bfloat16), ((0, b_pad - B), (0, 0))).T

    const2 = lambda i: (0, 0)  # weights/biases: VMEM-resident across grid steps

    flops = 2 * b_pad * (IN_DIM * PAD_HID + PAD_HID * PAD_HID + PAD_HID)
    weight_bytes = 2 * (PAD_HID * IN_DIM + PAD_HID * PAD_HID) + 4 * (3 * PAD_HID + 1)
    bytes_accessed = 2 * b_pad * IN_DIM + 4 * b_pad + weight_bytes

    # Explicit VMEM budget: double-buffered x/out tiles + resident weights +
    # generous allowance for the in-kernel f32/bf16 temporaries, plus headroom.
    vmem_bytes = (
        4 * IN_DIM * tile * 2                                     # xT bf16 buffers
        + 4 * tile * 4                                            # out f32 buffers
        + 2 * 2 * (PAD_HID * IN_DIM + PAD_HID * PAD_HID + PAD_HID)  # bf16 weights
        + 4 * 2 * PAD_HID * 4                                     # f32 biases
        + 6 * PAD_HID * tile * 4                                  # h1/h2 + casts
    )
    vmem_limit = int(min(64 * 1024 * 1024,
                         max(32 * 1024 * 1024, vmem_bytes + (8 << 20))))

    out = pl.pallas_call(
        mlp_kernel,
        out_shape=jax.ShapeDtypeStruct((1, b_pad), jnp.float32),
        grid=grid,
        in_specs=[
            pl.BlockSpec((IN_DIM, tile), lambda i: (0, i)),      # x^T tile
            pl.BlockSpec((PAD_HID, IN_DIM), const2),             # w1^T (bf16)
            pl.BlockSpec((PAD_HID, 1), const2),                  # b1 column
            pl.BlockSpec((PAD_HID, PAD_HID), const2),            # w2^T (bf16)
            pl.BlockSpec((PAD_HID, 1), const2),                  # b2 column
            pl.BlockSpec((PAD_HID, 1), const2),                  # w3 column (f32)
            pl.BlockSpec(memory_space=pltpu.MemorySpace.SMEM),   # b3 scalar
        ],
        out_specs=pl.BlockSpec((1, tile), lambda i: (0, i)),     # lane-dense row
        compiler_params=pltpu.CompilerParams(
            dimension_semantics=("parallel",),
            vmem_limit_bytes=vmem_limit),
        cost_estimate=pl.CostEstimate(
            flops=flops,
            transcendentals=b_pad,
            bytes_accessed=bytes_accessed),
    )(xT, w1T, b1, w2T, b2, w3, b3)

    return out[0, :B][:, None]


def init_params(key):
    """PyTorch-like Linear init (uniform +-1/sqrt(fan_in)), unpadded shapes."""
    def linear(key, fan_in, fan_out):
        kw, kb = jax.random.split(key)
        bound = 1.0 / jnp.sqrt(jnp.float32(fan_in))
        w = jax.random.uniform(kw, (fan_in, fan_out), jnp.float32, -bound, bound)
        b = jax.random.uniform(kb, (fan_out,), jnp.float32, -bound, bound)
        return w, b

    k1, k2, k3 = jax.random.split(key, 3)
    w1, b1 = linear(k1, IN_DIM, HID_DIM)
    w2, b2 = linear(k2, HID_DIM, HID_DIM)
    w3, b3 = linear(k3, HID_DIM, 1)
    return (w1, b1, w2, b2, w3, b3)


def pad_params(params):
    """Zero-pad hidden dims 200 -> 256 (inert through ReLU), transpose for the
    feature-major kernel, and store MXU operands (w1, w2) in bf16."""
    w1, b1, w2, b2, w3, b3 = params
    pad = PAD_HID - HID_DIM
    w1t = jnp.pad(w1, ((0, 0), (0, pad))).T.astype(jnp.bfloat16)        # (256, 24)
    b1c = jnp.pad(b1, ((0, pad),)).reshape(PAD_HID, 1)                  # (256, 1) f32
    w2t = jnp.pad(w2, ((0, pad), (0, pad))).T.astype(jnp.bfloat16)      # (256, 256)
    b2c = jnp.pad(b2, ((0, pad),)).reshape(PAD_HID, 1)                  # (256, 1) f32
    w3c = jnp.pad(w3, ((0, pad), (0, 0)))                               # (256, 1) f32
    b3s = b3.reshape(1, 1)                                              # (1, 1) SMEM
    return (w1t, b1c, w2t, b2c, w3c, b3s)


if __name__ == "__main__":
    key = jax.random.PRNGKey(0)
    kx, kp = jax.random.split(key)

    B = 8  # small test batch; kernel tiles/scales to arbitrary B
    x = jax.random.normal(kx, (B, IN_DIM), dtype=jnp.float32)
    raw_params = init_params(kp)
    padded_params = pad_params(raw_params)

    out = net_forward(x, padded_params)
    out = jax.block_until_ready(out)

    # Sanity check against a pure-JAX f32 reference (looser tolerance: the
    # kernel's matmuls use bf16 MXU operands).
    w1, b1, w2, b2, w3, b3 = raw_params
    ref = jax.nn.sigmoid(
        jnp.maximum(jnp.maximum(x @ w1 + b1, 0.0) @ w2 + b2, 0.0) @ w3 + b3
    )
    assert out.shape == (B, 1)
    assert jnp.allclose(out, ref, atol=1e-2, rtol=1e-2)

    print("KERNEL_OK")
</pallas_src>

<mosaic_0001>
module attributes {stable_mosaic.version = 11 : i64} {
  func.func @mlp_kernel(%arg0: i32, %arg1: memref<24x128xbf16, #tpu.memory_space<vmem>>, %arg2: memref<256x24xbf16, #tpu.memory_space<vmem>>, %arg3: memref<256x1xf32, #tpu.memory_space<vmem>>, %arg4: memref<256x256xbf16, #tpu.memory_space<vmem>>, %arg5: memref<256x1xf32, #tpu.memory_space<vmem>>, %arg6: memref<256x1xf32, #tpu.memory_space<vmem>>, %arg7: memref<1x1xf32, #tpu.memory_space<smem>>, %arg8: memref<1x128xf32, #tpu.memory_space<vmem>>) attributes {dimension_semantics = [#tpu.dimension_semantics<parallel>], iteration_bounds = array<i64: 1>, scalar_prefetch = 0 : i64, scratch_operands = 0 : i64, tpu.core_type = #tpu.core_type<tc>, window_params = [{transform_indices = @transform_0, window_bounds = array<i64: 24, 128>}, {pipeline_mode = #tpu.pipeline_mode<synchronous>, transform_indices = @transform_1, window_bounds = array<i64: 256, 24>}, {pipeline_mode = #tpu.pipeline_mode<synchronous>, transform_indices = @transform_2, window_bounds = array<i64: 256, 1>}, {pipeline_mode = #tpu.pipeline_mode<synchronous>, transform_indices = @transform_3, window_bounds = array<i64: 256, 256>}, {pipeline_mode = #tpu.pipeline_mode<synchronous>, transform_indices = @transform_4, window_bounds = array<i64: 256, 1>}, {pipeline_mode = #tpu.pipeline_mode<synchronous>, transform_indices = @transform_5, window_bounds = array<i64: 256, 1>}, {transform_indices = @transform_6, window_bounds = array<i64: 1, 1>}, {transform_indices = @transform_7, window_bounds = array<i64: 1, 128>}]} {
    %c0 = arith.constant 0 : index
    %c0_0 = arith.constant 0 : index
    %0 = vector.load %arg2[%c0, %c0_0] : memref<256x24xbf16, #tpu.memory_space<vmem>>, vector<256x24xbf16>
    %c0_1 = arith.constant 0 : index
    %c0_2 = arith.constant 0 : index
    %1 = vector.load %arg1[%c0_1, %c0_2] : memref<24x128xbf16, #tpu.memory_space<vmem>>, vector<24x128xbf16>
    %cst = arith.constant dense<0.000000e+00> : vector<256x128xf32>
    %2 = tpu.matmul %0, %1, %cst {dimension_numbers = #tpu.dot_dimension_numbers<[1], [0], [0], [1], [0, 0, 1, 1], [], []>} : vector<256x24xbf16>, vector<24x128xbf16>, vector<256x128xf32> -> vector<256x128xf32>
    %c0_3 = arith.constant 0 : index
    %c0_4 = arith.constant 0 : index
    %3 = vector.load %arg3[%c0_3, %c0_4] : memref<256x1xf32, #tpu.memory_space<vmem>>, vector<256x1xf32>
    %4 = vector.broadcast %3 : vector<256x1xf32> to vector<256x128xf32>
    %5 = arith.addf %2, %4 : vector<256x128xf32>
    %cst_5 = arith.constant 0.000000e+00 : f32
    %6 = vector.broadcast %cst_5 : f32 to vector<256x128xf32>
    %7 = arith.maximumf %5, %6 : vector<256x128xf32>
    %c0_6 = arith.constant 0 : index
    %c0_7 = arith.constant 0 : index
    %8 = vector.load %arg4[%c0_6, %c0_7] : memref<256x256xbf16, #tpu.memory_space<vmem>>, vector<256x256xbf16>
    %9 = arith.truncf %7 : vector<256x128xf32> to vector<256x128xbf16>
    %cst_8 = arith.constant dense<0.000000e+00> : vector<256x128xf32>
    %10 = tpu.matmul %8, %9, %cst_8 {dimension_numbers = #tpu.dot_dimension_numbers<[1], [0], [0], [1], [0, 0, 1, 1], [], []>} : vector<256x256xbf16>, vector<256x128xbf16>, vector<256x128xf32> -> vector<256x128xf32>
    %c0_9 = arith.constant 0 : index
    %c0_10 = arith.constant 0 : index
    %11 = vector.load %arg5[%c0_9, %c0_10] : memref<256x1xf32, #tpu.memory_space<vmem>>, vector<256x1xf32>
    %12 = vector.broadcast %11 : vector<256x1xf32> to vector<256x128xf32>
    %13 = arith.addf %10, %12 : vector<256x128xf32>
    %cst_11 = arith.constant 0.000000e+00 : f32
    %14 = vector.broadcast %cst_11 : f32 to vector<256x128xf32>
    %15 = arith.maximumf %13, %14 : vector<256x128xf32>
    %c0_12 = arith.constant 0 : index
    %c0_13 = arith.constant 0 : index
    %16 = vector.load %arg6[%c0_12, %c0_13] : memref<256x1xf32, #tpu.memory_space<vmem>>, vector<256x1xf32>
    %17 = vector.broadcast %16 : vector<256x1xf32> to vector<256x128xf32>
    %18 = arith.mulf %15, %17 : vector<256x128xf32>
    %cst_14 = arith.constant dense<0.000000e+00> : vector<128xf32>
    %19 = vector.multi_reduction <add>, %18, %cst_14 [0] : vector<256x128xf32> to vector<128xf32>
    %20 = vector.shape_cast %19 : vector<128xf32> to vector<1x128xf32>
    %c0_15 = arith.constant 0 : index
    %c0_16 = arith.constant 0 : index
    %21 = memref.load %arg7[%c0_15, %c0_16] : memref<1x1xf32, #tpu.memory_space<smem>>
    %22 = vector.broadcast %21 : f32 to vector<1x128xf32>
    %23 = arith.addf %20, %22 : vector<1x128xf32>
    %24 = arith.negf %23 : vector<1x128xf32>
    %25 = math.exp %24 : vector<1x128xf32>
    %cst_17 = arith.constant 1.000000e+00 : f32
    %26 = vector.broadcast %cst_17 : f32 to vector<1x128xf32>
    %27 = arith.addf %26, %25 : vector<1x128xf32>
    %28 = arith.divf %26, %27 : vector<1x128xf32>
    %c0_18 = arith.constant 0 : index
    %c0_19 = arith.constant 0 : index
    %29 = vector.load %arg8[%c0_18, %c0_19] : memref<1x128xf32, #tpu.memory_space<vmem>>, vector<1x128xf32>
    tpu.vector_store %arg8[%c0_18, %c0_19], %28 {strides = array<i32>} : memref<1x128xf32, #tpu.memory_space<vmem>>, vector<1x128xf32>,
    return
  }
  func.func @transform_0(%arg0: i32) -> (i32, i32) {
    %c0_i32 = arith.constant 0 : i32
    %c0_i32_0 = arith.constant 0 : i32
    return %c0_i32, %arg0 : i32, i32
  }
  func.func @transform_1(%arg0: i32) -> (i32, i32) {
    %c0_i32 = arith.constant 0 : i32
    %c0_i32_0 = arith.constant 0 : i32
    %c0_i32_1 = arith.constant 0 : i32
    return %c0_i32, %c0_i32_0 : i32, i32
  }
  func.func @transform_2(%arg0: i32) -> (i32, i32) {
    %c0_i32 = arith.constant 0 : i32
    %c0_i32_0 = arith.constant 0 : i32
    %c0_i32_1 = arith.constant 0 : i32
    return %c0_i32, %c0_i32_0 : i32, i32
  }
  func.func @transform_3(%arg0: i32) -> (i32, i32) {
    %c0_i32 = arith.constant 0 : i32
    %c0_i32_0 = arith.constant 0 : i32
    %c0_i32_1 = arith.constant 0 : i32
    return %c0_i32, %c0_i32_0 : i32, i32
  }
  func.func @transform_4(%arg0: i32) -> (i32, i32) {
    %c0_i32 = arith.constant 0 : i32
    %c0_i32_0 = arith.constant 0 : i32
    %c0_i32_1 = arith.constant 0 : i32
    return %c0_i32, %c0_i32_0 : i32, i32
  }
  func.func @transform_5(%arg0: i32) -> (i32, i32) {
    %c0_i32 = arith.constant 0 : i32
    %c0_i32_0 = arith.constant 0 : i32
    %c0_i32_1 = arith.constant 0 : i32
    return %c0_i32, %c0_i32_0 : i32, i32
  }
  func.func @transform_6(%arg0: i32) -> (i32, i32) {
    %c0_i32 = arith.constant 0 : i32
    %c0_i32_0 = arith.constant 0 : i32
    %c0_i32_1 = arith.constant 0 : i32
    return %c0_i32, %c0_i32_0 : i32, i32
  }
  func.func @transform_7(%arg0: i32) -> (i32, i32) {
    %c0_i32 = arith.constant 0 : i32
    %c0_i32_0 = arith.constant 0 : i32
    return %c0_i32, %arg0 : i32, i32
  }
}

</mosaic_0001>

<llo_original>
// kernel: net_forward.1
$region0: #{net_forward.1}
  #allocation0 [shape = 'u32[]', space=smem, size = 0x4, offset = 0x4, fixed_abs, tag = 'smem constant byte address 0x4 - core index']
  #allocation1 [shape = 'u32[144,128]{1,0:T(1,128)}', space=vmem, size = 0x12000, scoped, tag = 'internal scratch']
  #allocation2 [shape = 'f32[1,1]{1,0:T(1,128)S(6)}', space=smem, size = 0x200, scoped, tag = 'scoped memory for net_forward.1']
  %s0 = inlined_call_operand.vmem [shape: bf16[24,128], index: 0, kind: input, shape index: {}]
  %s1 = inlined_call_operand.vmem [shape: bf16[256,24], index: 1, kind: input, shape index: {}]
  %s2 = inlined_call_operand.vmem [shape: f32[256,1], index: 2, kind: input, shape index: {}]
  %s3 = inlined_call_operand.vmem [shape: bf16[256,256], index: 3, kind: input, shape index: {}]
  %s4 = inlined_call_operand.vmem [shape: f32[256,1], index: 4, kind: input, shape index: {}]
  %s5 = inlined_call_operand.vmem [shape: f32[256,1], index: 5, kind: input, shape index: {}]
  %s6 = inlined_call_operand.<no memory space> [shape: f32[1,1], index: 6, kind: input, shape index: {}]
  %s7 = inlined_call_operand.vmem [shape: f32[1,128], index: 7, kind: output, shape index: {}]
  %s8 = sld [smem:[#allocation0]]
  $region38: #{net_forward.1} parent=0
    _
  %s10 = ssub.s32 1, %s8
  %s11 = scalar_select 0, %s10, %s8
  %12 = sst [smem:[#allocation2]] %s6
  // Predicated region
  $region2: #{net_forward.1} parent=0 // pred_check
    _
  $region3: #{net_forward.1} parent=0 // pred_check_branch
    %14 = sbr.rel (0) target = $region5
  $region4: #{net_forward.1} parent=0 // pred_region
    _
  $region5: #{net_forward.1} parent=0 // pred_fallthru
    _
  // Predicated region
  $region6: #{net_forward.1} parent=0 // pred_check
    _
  $region7: #{net_forward.1} parent=0 // pred_check_branch
    %16 = sbr.rel (0) target = $region9
  $region8: #{net_forward.1} parent=0 // pred_region
    _
  $region9: #{net_forward.1} parent=0 // pred_fallthru
    _
  // Predicated region
  $region10: #{net_forward.1} parent=0 // pred_check
    _
  $region11: #{net_forward.1} parent=0 // pred_check_branch
    %18 = sbr.rel (0) target = $region13
  $region12: #{net_forward.1} parent=0 // pred_region
    _
  $region13: #{net_forward.1} parent=0 // pred_fallthru
    _
  // Predicated region
  $region14: #{net_forward.1} parent=0 // pred_check
    _
  $region15: #{net_forward.1} parent=0 // pred_check_branch
    %20 = sbr.rel (0) target = $region17
  $region16: #{net_forward.1} parent=0 // pred_region
    _
  $region17: #{net_forward.1} parent=0 // pred_fallthru
    _
  // Predicated region
  $region18: #{net_forward.1} parent=0 // pred_check
    _
  $region19: #{net_forward.1} parent=0 // pred_check_branch
    %22 = sbr.rel (0) target = $region21
  $region20: #{net_forward.1} parent=0 // pred_region
    _
  $region21: #{net_forward.1} parent=0 // pred_fallthru
    _
  // Predicated region
  $region22: #{net_forward.1} parent=0 // pred_check
    _
  $region23: #{net_forward.1} parent=0 // pred_check_branch
    %24 = sbr.rel (0) target = $region25
  $region24: #{net_forward.1} parent=0 // pred_region
    _
  $region25: #{net_forward.1} parent=0 // pred_fallthru
    _
  // Predicated region
  $region26: #{net_forward.1} parent=0 // pred_check
    _
  $region27: #{net_forward.1} parent=0 // pred_check_branch
    %26 = sbr.rel (0) target = $region29
  $region28: #{net_forward.1} parent=0 // pred_region
    _
  $region29: #{net_forward.1} parent=0 // pred_fallthru
    _
  %v28 = vld [vmem:[%s1] sm:$0xf]
  %v29 = vld [vmem:[%s1 + $0x4] sm:$0xf]
  %v30 = vld [vmem:[%s1 + $0x8] sm:$0xf]
  %v31 = vld [vmem:[%s1 + $0xc] sm:$0xf]
  %v32 = vld [vmem:[%s1 + $0x10] sm:$0xf]
  %v33 = vld [vmem:[%s1 + $0x14] sm:$0xf]
  %v34 = vld [vmem:[%s1 + $0x18] sm:$0xf]
  %v35 = vld [vmem:[%s1 + $0x1c] sm:$0xf]
  %v36 = vld [vmem:[%s1 + $0x20] sm:$0xf]
  %v37 = vld [vmem:[%s1 + $0x24] sm:$0xf]
  %v38 = vld [vmem:[%s1 + $0x28] sm:$0xf]
  %v39 = vld [vmem:[%s1 + $0x2c] sm:$0xf]
  %v40 = vld [vmem:[%s1 + $0x30] sm:$0xf]
  %v41 = vld [vmem:[%s1 + $0x34] sm:$0xf]
  %v42 = vld [vmem:[%s1 + $0x38] sm:$0xf]
  %v43 = vld [vmem:[%s1 + $0x3c] sm:$0xf]
  %v44 = vld [vmem:[%s1 + $0x40] sm:$0xf]
  %v45 = vld [vmem:[%s1 + $0x44] sm:$0xf]
  %v46 = vld [vmem:[%s1 + $0x48] sm:$0xf]
  %v47 = vld [vmem:[%s1 + $0x4c] sm:$0xf]
  %v48 = vld [vmem:[%s1 + $0x50] sm:$0xf]
  %v49 = vld [vmem:[%s1 + $0x54] sm:$0xf]
  %v50 = vld [vmem:[%s1 + $0x58] sm:$0xf]
  %v51 = vld [vmem:[%s1 + $0x5c] sm:$0xf]
  %v52 = vld [vmem:[%s1 + $0x60] sm:$0xf]
  %v53 = vld [vmem:[%s1 + $0x64] sm:$0xf]
  %v54 = vld [vmem:[%s1 + $0x68] sm:$0xf]
  %v55 = vld [vmem:[%s1 + $0x6c] sm:$0xf]
  %v56 = vld [vmem:[%s1 + $0x70] sm:$0xf]
  %v57 = vld [vmem:[%s1 + $0x74] sm:$0xf]
  %v58 = vld [vmem:[%s1 + $0x78] sm:$0xf]
  %v59 = vld [vmem:[%s1 + $0x7c] sm:$0xf]
  %v60 = vld [vmem:[%s0] sm:$0xf]
  %v61 = vld [vmem:[%s0 + $0x4] sm:$0xf]
  %v62 = vld [vmem:[%s0 + $0x8] sm:$0xf]
  %v63 = vld [vmem:[%s2] sm:$0xff]
  %v64 = vld [vmem:[%s2 + $0x8] sm:$0xff]
  %v65 = vld [vmem:[%s2 + $0x10] sm:$0xff]
  %v66 = vld [vmem:[%s2 + $0x18] sm:$0xff]
  %v67 = vld [vmem:[%s2 + $0x20] sm:$0xff]
  %v68 = vld [vmem:[%s2 + $0x28] sm:$0xff]
  %v69 = vld [vmem:[%s2 + $0x30] sm:$0xff]
  %v70 = vld [vmem:[%s2 + $0x38] sm:$0xff]
  %v71 = vld [vmem:[%s2 + $0x40] sm:$0xff]
  %v72 = vld [vmem:[%s2 + $0x48] sm:$0xff]
  %v73 = vld [vmem:[%s2 + $0x50] sm:$0xff]
  %v74 = vld [vmem:[%s2 + $0x58] sm:$0xff]
  %v75 = vld [vmem:[%s2 + $0x60] sm:$0xff]
  %v76 = vld [vmem:[%s2 + $0x68] sm:$0xff]
  %v77 = vld [vmem:[%s2 + $0x70] sm:$0xff]
  %v78 = vld [vmem:[%s2 + $0x78] sm:$0xff]
  %v79 = vld [vmem:[%s2 + $0x80] sm:$0xff]
  %v80 = vld [vmem:[%s2 + $0x88] sm:$0xff]
  %v81 = vld [vmem:[%s2 + $0x90] sm:$0xff]
  %v82 = vld [vmem:[%s2 + $0x98] sm:$0xff]
  %v83 = vld [vmem:[%s2 + $0xa0] sm:$0xff]
  %v84 = vld [vmem:[%s2 + $0xa8] sm:$0xff]
  %v85 = vld [vmem:[%s2 + $0xb0] sm:$0xff]
  %v86 = vld [vmem:[%s2 + $0xb8] sm:$0xff]
  %v87 = vld [vmem:[%s2 + $0xc0] sm:$0xff]
  %v88 = vld [vmem:[%s2 + $0xc8] sm:$0xff]
  %v89 = vld [vmem:[%s2 + $0xd0] sm:$0xff]
  %v90 = vld [vmem:[%s2 + $0xd8] sm:$0xff]
  %v91 = vld [vmem:[%s2 + $0xe0] sm:$0xff]
  %v92 = vld [vmem:[%s2 + $0xe8] sm:$0xff]
  %v93 = vld [vmem:[%s2 + $0xf0] sm:$0xff]
  %v94 = vld [vmem:[%s2 + $0xf8] sm:$0xff]
  %96 = vset.pattern.permute.xlu0 0
  %97 = vperm.xlu0 %96, %v63
  %v98 = vpop.permute.xlu0 %97
  %101 = vset.pattern.permute.xlu0 0
  %102 = vperm.xlu0 %101, %v64
  %v103 = vpop.permute.xlu0 %102
  %106 = vset.pattern.permute.xlu0 0
  %107 = vperm.xlu0 %106, %v65
  %v108 = vpop.permute.xlu0 %107
  %111 = vset.pattern.permute.xlu0 0
  %112 = vperm.xlu0 %111, %v66
  %v113 = vpop.permute.xlu0 %112
  %116 = vset.pattern.permute.xlu0 0
  %117 = vperm.xlu0 %116, %v67
  %v118 = vpop.permute.xlu0 %117
  %121 = vset.pattern.permute.xlu0 0
  %122 = vperm.xlu0 %121, %v68
  %v123 = vpop.permute.xlu0 %122
  %126 = vset.pattern.permute.xlu0 0
  %127 = vperm.xlu0 %126, %v69
  %v128 = vpop.permute.xlu0 %127
  %131 = vset.pattern.permute.xlu0 0
  %132 = vperm.xlu0 %131, %v70
  %v133 = vpop.permute.xlu0 %132
  %136 = vset.pattern.permute.xlu0 0
  %137 = vperm.xlu0 %136, %v71
  %v138 = vpop.permute.xlu0 %137
  %141 = vset.pattern.permute.xlu0 0
  %142 = vperm.xlu0 %141, %v72
  %v143 = vpop.permute.xlu0 %142
  %146 = vset.pattern.permute.xlu0 0
  %147 = vperm.xlu0 %146, %v73
  %v148 = vpop.permute.xlu0 %147
  %151 = vset.pattern.permute.xlu0 0
  %152 = vperm.xlu0 %151, %v74
  %v153 = vpop.permute.xlu0 %152
  %156 = vset.pattern.permute.xlu0 0
  %157 = vperm.xlu0 %156, %v75
  %v158 = vpop.permute.xlu0 %157
  %161 = vset.pattern.permute.xlu0 0
  %162 = vperm.xlu0 %161, %v76
  %v163 = vpop.permute.xlu0 %162
  %166 = vset.pattern.permute.xlu0 0
  %167 = vperm.xlu0 %166, %v77
  %v168 = vpop.permute.xlu0 %167
  %171 = vset.pattern.permute.xlu0 0
  %172 = vperm.xlu0 %171, %v78
  %v173 = vpop.permute.xlu0 %172
  %176 = vset.pattern.permute.xlu0 0
  %177 = vperm.xlu0 %176, %v79
  %v178 = vpop.permute.xlu0 %177
  %181 = vset.pattern.permute.xlu0 0
  %182 = vperm.xlu0 %181, %v80
  %v183 = vpop.permute.xlu0 %182
  %186 = vset.pattern.permute.xlu0 0
  %187 = vperm.xlu0 %186, %v81
  %v188 = vpop.permute.xlu0 %187
  %191 = vset.pattern.permute.xlu0 0
  %192 = vperm.xlu0 %191, %v82
  %v193 = vpop.permute.xlu0 %192
  %196 = vset.pattern.permute.xlu0 0
  %197 = vperm.xlu0 %196, %v83
  %v198 = vpop.permute.xlu0 %197
  %201 = vset.pattern.permute.xlu0 0
  %202 = vperm.xlu0 %201, %v84
  %v203 = vpop.permute.xlu0 %202
  %206 = vset.pattern.permute.xlu0 0
  %207 = vperm.xlu0 %206, %v85
  %v208 = vpop.permute.xlu0 %207
  %211 = vset.pattern.permute.xlu0 0
  %212 = vperm.xlu0 %211, %v86
  %v213 = vpop.permute.xlu0 %212
  %216 = vset.pattern.permute.xlu0 0
  %217 = vperm.xlu0 %216, %v87
  %v218 = vpop.permute.xlu0 %217
  %221 = vset.pattern.permute.xlu0 0
  %222 = vperm.xlu0 %221, %v88
  %v223 = vpop.permute.xlu0 %222
  %226 = vset.pattern.permute.xlu0 0
  %227 = vperm.xlu0 %226, %v89
  %v228 = vpop.permute.xlu0 %227
  %231 = vset.pattern.permute.xlu0 0
  %232 = vperm.xlu0 %231, %v90
  %v233 = vpop.permute.xlu0 %232
  %236 = vset.pattern.permute.xlu0 0
  %237 = vperm.xlu0 %236, %v91
  %v238 = vpop.permute.xlu0 %237
  %241 = vset.pattern.permute.xlu0 0
  %242 = vperm.xlu0 %241, %v92
  %v243 = vpop.permute.xlu0 %242
  %246 = vset.pattern.permute.xlu0 0
  %247 = vperm.xlu0 %246, %v93
  %v248 = vpop.permute.xlu0 %247
  %251 = vset.pattern.permute.xlu0 0
  %252 = vperm.xlu0 %251, %v94
  %v253 = vpop.permute.xlu0 %252
  %v287 = vunpack.c.l.b16 %v28
  %v288 = vunpack.c.l.b16 %v29
  %v289 = vunpack.c.l.b16 %v30
  %v290 = vunpack.c.l.b16 %v31
  %v291 = vunpack.c.l.b16 %v32
  %v292 = vunpack.c.l.b16 %v33
  %v293 = vunpack.c.l.b16 %v34
  %v294 = vunpack.c.l.b16 %v35
  %v295 = vunpack.c.l.b16 %v36
  %v296 = vunpack.c.l.b16 %v37
  %v297 = vunpack.c.l.b16 %v38
  %v298 = vunpack.c.l.b16 %v39
  %v299 = vunpack.c.l.b16 %v40
  %v300 = vunpack.c.l.b16 %v41
  %v301 = vunpack.c.l.b16 %v42
  %v302 = vunpack.c.l.b16 %v43
  %v303 = vunpack.c.l.b16 %v44
  %v304 = vunpack.c.l.b16 %v45
  %v305 = vunpack.c.l.b16 %v46
  %v306 = vunpack.c.l.b16 %v47
  %v307 = vunpack.c.l.b16 %v48
  %v308 = vunpack.c.l.b16 %v49
  %v309 = vunpack.c.l.b16 %v50
  %v310 = vunpack.c.l.b16 %v51
  %v311 = vunpack.c.l.b16 %v52
  %v312 = vunpack.c.l.b16 %v53
  %v313 = vunpack.c.l.b16 %v54
  %v314 = vunpack.c.l.b16 %v55
  %v315 = vunpack.c.l.b16 %v56
  %v316 = vunpack.c.l.b16 %v57
  %v317 = vunpack.c.l.b16 %v58
  %v318 = vunpack.c.l.b16 %v59
  %v319 = vpack.c.b16 %v288, %v287
  %v320 = vpack.c.b16 %v290, %v289
  %v321 = vpack.c.b16 %v292, %v291
  %v322 = vpack.c.b16 %v294, %v293
  %v323 = vpack.c.b16 %v296, %v295
  %v324 = vpack.c.b16 %v298, %v297
  %v325 = vpack.c.b16 %v300, %v299
  %v326 = vpack.c.b16 %v302, %v301
  %v327 = vpack.c.b16 %v304, %v303
  %v328 = vpack.c.b16 %v306, %v305
  %v329 = vpack.c.b16 %v308, %v307
  %v330 = vpack.c.b16 %v310, %v309
  %v331 = vpack.c.b16 %v312, %v311
  %v332 = vpack.c.b16 %v314, %v313
  %v333 = vpack.c.b16 %v316, %v315
  %v334 = vpack.c.b16 %v318, %v317
  %v338 = vunpack.c.l.b16 %v60
  %v339 = vunpack.c.l.b16 %v61
  %v340 = vunpack.c.l.b16 %v62
  %v341 = vpack.c.b16 %v339, %v338
  %v342 = vpack.c.b16 %v340, %v340
  %vm344 = vcmask 195584
  %v346 = vsel %vm344, %v319, 0
  %v349 = vsel %vm344, %v320, 0
  %v352 = vsel %vm344, %v321, 0
  %v355 = vsel %vm344, %v322, 0
  %v358 = vsel %vm344, %v323, 0
  %v361 = vsel %vm344, %v324, 0
  %v364 = vsel %vm344, %v325, 0
  %v367 = vsel %vm344, %v326, 0
  %v370 = vsel %vm344, %v327, 0
  %v373 = vsel %vm344, %v328, 0
  %v376 = vsel %vm344, %v329, 0
  %v379 = vsel %vm344, %v330, 0
  %v382 = vsel %vm344, %v331, 0
  %v385 = vsel %vm344, %v332, 0
  %v388 = vsel %vm344, %v333, 0
  %v391 = vsel %vm344, %v334, 0
  %vm393 = vcmask 1043456
  %v395 = vsel %vm393, %v342, 0
  %397 = vmatprep.subr.bf16.mxu0 0
  %398 = vmatpush1.bf16.msra.mxu0 0
  %399 = vmatprep.subr.bf16.mxu0 0
  %400 = vmatpush1.bf16.msra.mxu0 0
  %401 = vmatprep.subr.bf16.mxu0 0
  %402 = vmatpush1.bf16.msra.mxu0 0
  %403 = vmatprep.subr.bf16.mxu0 0
  %404 = vmatpush1.bf16.msra.mxu0 0
  %405 = vmatprep.subr.bf16.mxu0 0
  %406 = vmatpush1.bf16.msra.mxu0 0
  %407 = vmatprep.subr.bf16.mxu0 0
  %408 = vmatpush1.bf16.msra.mxu0 0
  %409 = vmatprep.subr.bf16.mxu0 0
  %410 = vmatpush1.bf16.msra.mxu0 %v395
  %411 = vmatprep.subr.bf16.mxu0 0
  %412 = vmatpush1.bf16.msra.mxu0 %v341
  %413 = vmatprep.subr.bf16.mxu0 0
  %414 = vmatpush2.bf16.msra.mxu0 0
  %415 = vmatprep.subr.bf16.mxu0 0
  %416 = vmatpush2.bf16.msra.mxu0 0
  %417 = vmatprep.subr.bf16.mxu0 0
  %418 = vmatpush2.bf16.msra.mxu0 0
  %419 = vmatprep.subr.bf16.mxu0 0
  %420 = vmatpush2.bf16.msra.mxu0 0
  %421 = vmatprep.subr.bf16.mxu0 0
  %422 = vmatpush2.bf16.msra.mxu0 0
  %423 = vmatprep.subr.bf16.mxu0 0
  %424 = vmatpush2.bf16.msra.mxu0 0
  %425 = vmatprep.subr.bf16.mxu0 0
  %426 = vmatpush2.bf16.msra.mxu0 0
  %427 = vmatprep.subr.bf16.mxu0 0
  %428 = vmatpush2.bf16.msra.mxu0 0
  %429 = vmatprep.mubr.bf16.mxu0 0
  %430 = vmatmul.mubr.bf16.gmra.mxu0 %v346
  %v431 = vpop.f32.mrf.mxu0
  %v432 = vadd.f32 %v98, %v431
  %v433 = vpop.f32.mrf.mxu0
  %v434 = vpop.f32.mrf.mxu0
  %v435 = vadd.f32 %v103, %v434
  %v436 = vpop.f32.mrf.mxu0
  %437 = vmatprep.mubr.bf16.mxu0 0
  %438 = vmatmul.mubr.bf16.gmra.mxu0 %v349
  %v439 = vpop.f32.mrf.mxu0
  %v440 = vadd.f32 %v108, %v439
  %v441 = vpop.f32.mrf.mxu0
  %v442 = vpop.f32.mrf.mxu0
  %v443 = vadd.f32 %v113, %v442
  %v444 = vpop.f32.mrf.mxu0
  %445 = vmatprep.mubr.bf16.mxu0 0
  %446 = vmatmul.mubr.bf16.gmra.mxu0 %v352
  %v447 = vpop.f32.mrf.mxu0
  %v448 = vadd.f32 %v118, %v447
  %v449 = vpop.f32.mrf.mxu0
  %v450 = vpop.f32.mrf.mxu0
  %v451 = vadd.f32 %v123, %v450
  %v452 = vpop.f32.mrf.mxu0
  %453 = vmatprep.mubr.bf16.mxu0 0
  %454 = vmatmul.mubr.bf16.gmra.mxu0 %v355
  %v455 = vpop.f32.mrf.mxu0
  %v456 = vadd.f32 %v128, %v455
  %v457 = vpop.f32.mrf.mxu0
  %v458 = vpop.f32.mrf.mxu0
  %v459 = vadd.f32 %v133, %v458
  %v460 = vpop.f32.mrf.mxu0
  %461 = vmatprep.mubr.bf16.mxu0 0
  %462 = vmatmul.mubr.bf16.gmra.mxu0 %v358
  %v463 = vpop.f32.mrf.mxu0
  %v464 = vadd.f32 %v138, %v463
  %v465 = vpop.f32.mrf.mxu0
  %v466 = vpop.f32.mrf.mxu0
  %v467 = vadd.f32 %v143, %v466
  %v468 = vpop.f32.mrf.mxu0
  %469 = vmatprep.mubr.bf16.mxu0 0
  %470 = vmatmul.mubr.bf16.gmra.mxu0 %v361
  %v471 = vpop.f32.mrf.mxu0
  %v472 = vadd.f32 %v148, %v471
  %v473 = vpop.f32.mrf.mxu0
  %v474 = vpop.f32.mrf.mxu0
  %v475 = vadd.f32 %v153, %v474
  %v476 = vpop.f32.mrf.mxu0
  %477 = vmatprep.mubr.bf16.mxu0 0
  %478 = vmatmul.mubr.bf16.gmra.mxu0 %v364
  %v479 = vpop.f32.mrf.mxu0
  %v480 = vadd.f32 %v158, %v479
  %v481 = vpop.f32.mrf.mxu0
  %v482 = vpop.f32.mrf.mxu0
  %v483 = vadd.f32 %v163, %v482
  %v484 = vpop.f32.mrf.mxu0
  %485 = vmatprep.mubr.bf16.mxu0 0
  %486 = vmatmul.mubr.bf16.gmra.mxu0 %v367
  %v487 = vpop.f32.mrf.mxu0
  %v488 = vadd.f32 %v168, %v487
  %v489 = vpop.f32.mrf.mxu0
  %v490 = vpop.f32.mrf.mxu0
  %v491 = vadd.f32 %v173, %v490
  %v492 = vpop.f32.mrf.mxu0
  %493 = vmatprep.mubr.bf16.mxu0 0
  %494 = vmatmul.mubr.bf16.gmra.mxu0 %v370
  %v495 = vpop.f32.mrf.mxu0
  %v496 = vadd.f32 %v178, %v495
  %v497 = vpop.f32.mrf.mxu0
  %v498 = vpop.f32.mrf.mxu0
  %v499 = vadd.f32 %v183, %v498
  %v500 = vpop.f32.mrf.mxu0
  %501 = vmatprep.mubr.bf16.mxu0 0
  %502 = vmatmul.mubr.bf16.gmra.mxu0 %v373
  %v503 = vpop.f32.mrf.mxu0
  %v504 = vadd.f32 %v188, %v503
  %v505 = vpop.f32.mrf.mxu0
  %v506 = vpop.f32.mrf.mxu0
  %v507 = vadd.f32 %v193, %v506
  %v508 = vpop.f32.mrf.mxu0
  %509 = vmatprep.mubr.bf16.mxu0 0
  %510 = vmatmul.mubr.bf16.gmra.mxu0 %v376
  %v511 = vpop.f32.mrf.mxu0
  %v512 = vadd.f32 %v198, %v511
  %v513 = vpop.f32.mrf.mxu0
  %v514 = vpop.f32.mrf.mxu0
  %v515 = vadd.f32 %v203, %v514
  %v516 = vpop.f32.mrf.mxu0
  %517 = vmatprep.mubr.bf16.mxu0 0
  %518 = vmatmul.mubr.bf16.gmra.mxu0 %v379
  %v519 = vpop.f32.mrf.mxu0
  %v520 = vadd.f32 %v208, %v519
  %v521 = vpop.f32.mrf.mxu0
  %v522 = vpop.f32.mrf.mxu0
  %v523 = vadd.f32 %v213, %v522
  %v524 = vpop.f32.mrf.mxu0
  %525 = vmatprep.mubr.bf16.mxu0 0
  %526 = vmatmul.mubr.bf16.gmra.mxu0 %v382
  %v527 = vpop.f32.mrf.mxu0
  %v528 = vadd.f32 %v218, %v527
  %v529 = vpop.f32.mrf.mxu0
  %v530 = vpop.f32.mrf.mxu0
  %v531 = vadd.f32 %v223, %v530
  %v532 = vpop.f32.mrf.mxu0
  %533 = vmatprep.mubr.bf16.mxu0 0
  %534 = vmatmul.mubr.bf16.gmra.mxu0 %v385
  %v535 = vpop.f32.mrf.mxu0
  %v536 = vadd.f32 %v228, %v535
  %v537 = vpop.f32.mrf.mxu0
  %v538 = vpop.f32.mrf.mxu0
  %v539 = vadd.f32 %v233, %v538
  %v540 = vpop.f32.mrf.mxu0
  %541 = vmatprep.mubr.bf16.mxu0 0
  %542 = vmatmul.mubr.bf16.gmra.mxu0 %v388
  %v543 = vpop.f32.mrf.mxu0
  %v544 = vadd.f32 %v238, %v543
  %v545 = vpop.f32.mrf.mxu0
  %v546 = vpop.f32.mrf.mxu0
  %v547 = vadd.f32 %v243, %v546
  %v548 = vpop.f32.mrf.mxu0
  %549 = vmatprep.mubr.bf16.mxu0 0
  %550 = vmatmul.mubr.bf16.gmra.mxu0 %v391
  %v551 = vpop.f32.mrf.mxu0
  %v552 = vadd.f32 %v248, %v551
  %v553 = vpop.f32.mrf.mxu0
  %v554 = vpop.f32.mrf.mxu0
  %v555 = vadd.f32 %v253, %v554
  %v556 = vpop.f32.mrf.mxu0
  %557 = vdwg.mxu0
  %v558 = vmax.f32 %v432, 0.0
  %v559 = vmax.f32 %v435, 0.0
  %v560 = vmax.f32 %v440, 0.0
  %v561 = vmax.f32 %v443, 0.0
  %v562 = vmax.f32 %v448, 0.0
  %v563 = vmax.f32 %v451, 0.0
  %v564 = vmax.f32 %v456, 0.0
  %v565 = vmax.f32 %v459, 0.0
  %v566 = vmax.f32 %v464, 0.0
  %v567 = vmax.f32 %v467, 0.0
  %v568 = vmax.f32 %v472, 0.0
  %v569 = vmax.f32 %v475, 0.0
  %v570 = vmax.f32 %v480, 0.0
  %v571 = vmax.f32 %v483, 0.0
  %v572 = vmax.f32 %v488, 0.0
  %v573 = vmax.f32 %v491, 0.0
  %v574 = vmax.f32 %v496, 0.0
  %v575 = vmax.f32 %v499, 0.0
  %v576 = vmax.f32 %v504, 0.0
  %v577 = vmax.f32 %v507, 0.0
  %v578 = vmax.f32 %v512, 0.0
  %v579 = vmax.f32 %v515, 0.0
  %v580 = vmax.f32 %v520, 0.0
  %v581 = vmax.f32 %v523, 0.0
  %v582 = vmax.f32 %v528, 0.0
  %v583 = vmax.f32 %v531, 0.0
  %v584 = vmax.f32 %v536, 0.0
  %v585 = vmax.f32 %v539, 0.0
  %v586 = vmax.f32 %v544, 0.0
  %v587 = vmax.f32 %v547, 0.0
  %v588 = vmax.f32 %v552, 0.0
  %v589 = vmax.f32 %v555, 0.0
  %v590 = vld [vmem:[%s3] sm:$0xff]
  %v591 = vld [vmem:[%s3 + $0x8] sm:$0xff]
  %v592 = vld [vmem:[%s3 + $0x10] sm:$0xff]
  %v593 = vld [vmem:[%s3 + $0x18] sm:$0xff]
  %v594 = vld [vmem:[%s3 + $0x20] sm:$0xff]
  %v595 = vld [vmem:[%s3 + $0x28] sm:$0xff]
  %v596 = vld [vmem:[%s3 + $0x30] sm:$0xff]
  %v597 = vld [vmem:[%s3 + $0x38] sm:$0xff]
  %v598 = vld [vmem:[%s3 + $0x40] sm:$0xff]
  %v599 = vld [vmem:[%s3 + $0x48] sm:$0xff]
  %v600 = vld [vmem:[%s3 + $0x50] sm:$0xff]
  %v601 = vld [vmem:[%s3 + $0x58] sm:$0xff]
  %v602 = vld [vmem:[%s3 + $0x60] sm:$0xff]
  %v603 = vld [vmem:[%s3 + $0x68] sm:$0xff]
  %v604 = vld [vmem:[%s3 + $0x70] sm:$0xff]
  %v605 = vld [vmem:[%s3 + $0x78] sm:$0xff]
  %v606 = vld [vmem:[%s3 + $0x80] sm:$0xff]
  %v607 = vld [vmem:[%s3 + $0x88] sm:$0xff]
  %v608 = vld [vmem:[%s3 + $0x90] sm:$0xff]
  %v609 = vld [vmem:[%s3 + $0x98] sm:$0xff]
  %v610 = vld [vmem:[%s3 + $0xa0] sm:$0xff]
  %v611 = vld [vmem:[%s3 + $0xa8] sm:$0xff]
  %v612 = vld [vmem:[%s3 + $0xb0] sm:$0xff]
  %v613 = vld [vmem:[%s3 + $0xb8] sm:$0xff]
  %v614 = vld [vmem:[%s3 + $0xc0] sm:$0xff]
  %v615 = vld [vmem:[%s3 + $0xc8] sm:$0xff]
  %v616 = vld [vmem:[%s3 + $0xd0] sm:$0xff]
  %v617 = vld [vmem:[%s3 + $0xd8] sm:$0xff]
  %v618 = vld [vmem:[%s3 + $0xe0] sm:$0xff]
  %v619 = vld [vmem:[%s3 + $0xe8] sm:$0xff]
  %v620 = vld [vmem:[%s3 + $0xf0] sm:$0xff]
  %v621 = vld [vmem:[%s3 + $0xf8] sm:$0xff]
  %v622 = vpack.c.bf16 %v559, %v558
  %v623 = vpack.c.bf16 %v561, %v560
  %v624 = vpack.c.bf16 %v563, %v562
  %v625 = vpack.c.bf16 %v565, %v564
  %v626 = vpack.c.bf16 %v567, %v566
  %v627 = vpack.c.bf16 %v569, %v568
  %v628 = vpack.c.bf16 %v571, %v570
  %v629 = vpack.c.bf16 %v573, %v572
  %v630 = vpack.c.bf16 %v575, %v574
  %v631 = vpack.c.bf16 %v577, %v576
  %v632 = vpack.c.bf16 %v579, %v578
  %v633 = vpack.c.bf16 %v581, %v580
  %v634 = vpack.c.bf16 %v583, %v582
  %v635 = vpack.c.bf16 %v585, %v584
  %v636 = vpack.c.bf16 %v587, %v586
  %v637 = vpack.c.bf16 %v589, %v588
  %v638 = vld [vmem:[%s4] sm:$0xff]
  %v639 = vld [vmem:[%s4 + $0x8] sm:$0xff]
  %v640 = vld [vmem:[%s4 + $0x10] sm:$0xff]
  %v641 = vld [vmem:[%s4 + $0x18] sm:$0xff]
  %v642 = vld [vmem:[%s4 + $0x20] sm:$0xff]
  %v643 = vld [vmem:[%s4 + $0x28] sm:$0xff]
  %v644 = vld [vmem:[%s4 + $0x30] sm:$0xff]
  %v645 = vld [vmem:[%s4 + $0x38] sm:$0xff]
  %v646 = vld [vmem:[%s4 + $0x40] sm:$0xff]
  %v647 = vld [vmem:[%s4 + $0x48] sm:$0xff]
  %v648 = vld [vmem:[%s4 + $0x50] sm:$0xff]
  %v649 = vld [vmem:[%s4 + $0x58] sm:$0xff]
  %v650 = vld [vmem:[%s4 + $0x60] sm:$0xff]
  %v651 = vld [vmem:[%s4 + $0x68] sm:$0xff]
  %v652 = vld [vmem:[%s4 + $0x70] sm:$0xff]
  %v653 = vld [vmem:[%s4 + $0x78] sm:$0xff]
  %v654 = vld [vmem:[%s4 + $0x80] sm:$0xff]
  %v655 = vld [vmem:[%s4 + $0x88] sm:$0xff]
  %v656 = vld [vmem:[%s4 + $0x90] sm:$0xff]
  %v657 = vld [vmem:[%s4 + $0x98] sm:$0xff]
  %v658 = vld [vmem:[%s4 + $0xa0] sm:$0xff]
  %v659 = vld [vmem:[%s4 + $0xa8] sm:$0xff]
  %v660 = vld [vmem:[%s4 + $0xb0] sm:$0xff]
  %v661 = vld [vmem:[%s4 + $0xb8] sm:$0xff]
  %v662 = vld [vmem:[%s4 + $0xc0] sm:$0xff]
  %v663 = vld [vmem:[%s4 + $0xc8] sm:$0xff]
  %v664 = vld [vmem:[%s4 + $0xd0] sm:$0xff]
  %v665 = vld [vmem:[%s4 + $0xd8] sm:$0xff]
  %v666 = vld [vmem:[%s4 + $0xe0] sm:$0xff]
  %v667 = vld [vmem:[%s4 + $0xe8] sm:$0xff]
  %v668 = vld [vmem:[%s4 + $0xf0] sm:$0xff]
  %v669 = vld [vmem:[%s4 + $0xf8] sm:$0xff]
  %671 = vset.pattern.permute.xlu0 0
  %672 = vperm.xlu0 %671, %v638
  %v673 = vpop.permute.xlu0 %672
  %676 = vset.pattern.permute.xlu0 0
  %677 = vperm.xlu0 %676, %v639
  %v678 = vpop.permute.xlu0 %677
  %681 = vset.pattern.permute.xlu0 0
  %682 = vperm.xlu0 %681, %v640
  %v683 = vpop.permute.xlu0 %682
  %686 = vset.pattern.permute.xlu0 0
  %687 = vperm.xlu0 %686, %v641
  %v688 = vpop.permute.xlu0 %687
  %691 = vset.pattern.permute.xlu0 0
  %692 = vperm.xlu0 %691, %v642
  %v693 = vpop.permute.xlu0 %692
  %696 = vset.pattern.permute.xlu0 0
  %697 = vperm.xlu0 %696, %v643
  %v698 = vpop.permute.xlu0 %697
  %701 = vset.pattern.permute.xlu0 0
  %702 = vperm.xlu0 %701, %v644
  %v703 = vpop.permute.xlu0 %702
  %706 = vset.pattern.permute.xlu0 0
  %707 = vperm.xlu0 %706, %v645
  %v708 = vpop.permute.xlu0 %707
  %711 = vset.pattern.permute.xlu0 0
  %712 = vperm.xlu0 %711, %v646
  %v713 = vpop.permute.xlu0 %712
  %716 = vset.pattern.permute.xlu0 0
  %717 = vperm.xlu0 %716, %v647
  %v718 = vpop.permute.xlu0 %717
  %721 = vset.pattern.permute.xlu0 0
  %722 = vperm.xlu0 %721, %v648
  %v723 = vpop.permute.xlu0 %722
  %726 = vset.pattern.permute.xlu0 0
  %727 = vperm.xlu0 %726, %v649
  %v728 = vpop.permute.xlu0 %727
  %731 = vset.pattern.permute.xlu0 0
  %732 = vperm.xlu0 %731, %v650
  %v733 = vpop.permute.xlu0 %732
  %736 = vset.pattern.permute.xlu0 0
  %737 = vperm.xlu0 %736, %v651
  %v738 = vpop.permute.xlu0 %737
  %741 = vset.pattern.permute.xlu0 0
  %742 = vperm.xlu0 %741, %v652
  %v743 = vpop.permute.xlu0 %742
  %746 = vset.pattern.permute.xlu0 0
  %747 = vperm.xlu0 %746, %v653
  %v748 = vpop.permute.xlu0 %747
  %751 = vset.pattern.permute.xlu0 0
  %752 = vperm.xlu0 %751, %v654
  %v753 = vpop.permute.xlu0 %752
  %756 = vset.pattern.permute.xlu0 0
  %757 = vperm.xlu0 %756, %v655
  %v758 = vpop.permute.xlu0 %757
  %761 = vset.pattern.permute.xlu0 0
  %762 = vperm.xlu0 %761, %v656
  %v763 = vpop.permute.xlu0 %762
  %766 = vset.pattern.permute.xlu0 0
  %767 = vperm.xlu0 %766, %v657
  %v768 = vpop.permute.xlu0 %767
  %771 = vset.pattern.permute.xlu0 0
  %772 = vperm.xlu0 %771, %v658
  %v773 = vpop.permute.xlu0 %772
  %776 = vset.pattern.permute.xlu0 0
  %777 = vperm.xlu0 %776, %v659
  %v778 = vpop.permute.xlu0 %777
  %781 = vset.pattern.permute.xlu0 0
  %782 = vperm.xlu0 %781, %v660
  %v783 = vpop.permute.xlu0 %782
  %786 = vset.pattern.permute.xlu0 0
  %787 = vperm.xlu0 %786, %v661
  %v788 = vpop.permute.xlu0 %787
  %791 = vset.pattern.permute.xlu0 0
  %792 = vperm.xlu0 %791, %v662
  %v793 = vpop.permute.xlu0 %792
  %796 = vset.pattern.permute.xlu0 0
  %797 = vperm.xlu0 %796, %v663
  %v798 = vpop.permute.xlu0 %797
  %801 = vset.pattern.permute.xlu0 0
  %802 = vperm.xlu0 %801, %v664
  %v803 = vpop.permute.xlu0 %802
  %806 = vset.pattern.permute.xlu0 0
  %807 = vperm.xlu0 %806, %v665
  %v808 = vpop.permute.xlu0 %807
  %811 = vset.pattern.permute.xlu0 0
  %812 = vperm.xlu0 %811, %v666
  %v813 = vpop.permute.xlu0 %812
  %816 = vset.pattern.permute.xlu0 0
  %817 = vperm.xlu0 %816, %v667
  %v818 = vpop.permute.xlu0 %817
  %821 = vset.pattern.permute.xlu0 0
  %822 = vperm.xlu0 %821, %v668
  %v823 = vpop.permute.xlu0 %822
  %826 = vset.pattern.permute.xlu0 0
  %827 = vperm.xlu0 %826, %v669
  %v828 = vpop.permute.xlu0 %827
  %v862 = vunpack.c.l.b16 %v590
  %v863 = vunpack.c.h.b16 %v590
  %v864 = vunpack.c.l.b16 %v591
  %v865 = vunpack.c.h.b16 %v591
  %v866 = vunpack.c.l.b16 %v592
  %v867 = vunpack.c.h.b16 %v592
  %v868 = vunpack.c.l.b16 %v593
  %v869 = vunpack.c.h.b16 %v593
  %v870 = vunpack.c.l.b16 %v594
  %v871 = vunpack.c.h.b16 %v594
  %v872 = vunpack.c.l.b16 %v595
  %v873 = vunpack.c.h.b16 %v595
  %v874 = vunpack.c.l.b16 %v596
  %v875 = vunpack.c.h.b16 %v596
  %v876 = vunpack.c.l.b16 %v597
  %v877 = vunpack.c.h.b16 %v597
  %v878 = vunpack.c.l.b16 %v598
  %v879 = vunpack.c.h.b16 %v598
  %v880 = vunpack.c.l.b16 %v599
  %v881 = vunpack.c.h.b16 %v599
  %v882 = vunpack.c.l.b16 %v600
  %v883 = vunpack.c.h.b16 %v600
  %v884 = vunpack.c.l.b16 %v601
  %v885 = vunpack.c.h.b16 %v601
  %v886 = vunpack.c.l.b16 %v602
  %v887 = vunpack.c.h.b16 %v602
  %v888 = vunpack.c.l.b16 %v603
  %v889 = vunpack.c.h.b16 %v603
  %v890 = vunpack.c.l.b16 %v604
  %v891 = vunpack.c.h.b16 %v604
  %v892 = vunpack.c.l.b16 %v605
  %v893 = vunpack.c.h.b16 %v605
  %v894 = vunpack.c.l.b16 %v606
  %v895 = vunpack.c.h.b16 %v606
  %v896 = vunpack.c.l.b16 %v607
  %v897 = vunpack.c.h.b16 %v607
  %v898 = vunpack.c.l.b16 %v608
  %v899 = vunpack.c.h.b16 %v608
  %v900 = vunpack.c.l.b16 %v609
  %v901 = vunpack.c.h.b16 %v609
  %v902 = vunpack.c.l.b16 %v610
  %v903 = vunpack.c.h.b16 %v610
  %v904 = vunpack.c.l.b16 %v611
  %v905 = vunpack.c.h.b16 %v611
  %v906 = vunpack.c.l.b16 %v612
  %v907 = vunpack.c.h.b16 %v612
  %v908 = vunpack.c.l.b16 %v613
  %v909 = vunpack.c.h.b16 %v613
  %v910 = vunpack.c.l.b16 %v614
  %v911 = vunpack.c.h.b16 %v614
  %v912 = vunpack.c.l.b16 %v615
  %v913 = vunpack.c.h.b16 %v615
  %v914 = vunpack.c.l.b16 %v616
  %v915 = vunpack.c.h.b16 %v616
  %v916 = vunpack.c.l.b16 %v617
  %v917 = vunpack.c.h.b16 %v617
  %v918 = vunpack.c.l.b16 %v618
  %v919 = vunpack.c.h.b16 %v618
  %v920 = vunpack.c.l.b16 %v619
  %v921 = vunpack.c.h.b16 %v619
  %v922 = vunpack.c.l.b16 %v620
  %v923 = vunpack.c.h.b16 %v620
  %v924 = vunpack.c.l.b16 %v621
  %v925 = vunpack.c.h.b16 %v621
  %v926 = vpack.c.b16 %v864, %v862
  %v927 = vpack.c.b16 %v865, %v863
  %v928 = vpack.c.b16 %v868, %v866
  %v929 = vpack.c.b16 %v869, %v867
  %v930 = vpack.c.b16 %v872, %v870
  %v931 = vpack.c.b16 %v873, %v871
  %v932 = vpack.c.b16 %v876, %v874
  %v933 = vpack.c.b16 %v877, %v875
  %v934 = vpack.c.b16 %v880, %v878
  %v935 = vpack.c.b16 %v881, %v879
  %v936 = vpack.c.b16 %v884, %v882
  %v937 = vpack.c.b16 %v885, %v883
  %v938 = vpack.c.b16 %v888, %v886
  %v939 = vpack.c.b16 %v889, %v887
  %v940 = vpack.c.b16 %v892, %v890
  %v941 = vpack.c.b16 %v893, %v891
  %v942 = vpack.c.b16 %v896, %v894
  %v943 = vpack.c.b16 %v897, %v895
  %v944 = vpack.c.b16 %v900, %v898
  %v945 = vpack.c.b16 %v901, %v899
  %v946 = vpack.c.b16 %v904, %v902
  %v947 = vpack.c.b16 %v905, %v903
  %v948 = vpack.c.b16 %v908, %v906
  %v949 = vpack.c.b16 %v909, %v907
  %v950 = vpack.c.b16 %v912, %v910
  %v951 = vpack.c.b16 %v913, %v911
  %v952 = vpack.c.b16 %v916, %v914
  %v953 = vpack.c.b16 %v917, %v915
  %v954 = vpack.c.b16 %v920, %v918
  %v955 = vpack.c.b16 %v921, %v919
  %v956 = vpack.c.b16 %v924, %v922
  %v957 = vpack.c.b16 %v925, %v923
  %990 = vmatprep.subr.bf16.mxu0 0
  %991 = vmatpush1.bf16.msra.mxu0 %v629
  %992 = vmatprep.subr.bf16.mxu0 0
  %993 = vmatpush1.bf16.msra.mxu0 %v628
  %994 = vmatprep.subr.bf16.mxu0 0
  %995 = vmatpush1.bf16.msra.mxu0 %v627
  %996 = vmatprep.subr.bf16.mxu0 0
  %997 = vmatpush1.bf16.msra.mxu0 %v626
  %998 = vmatprep.subr.bf16.mxu0 0
  %999 = vmatpush1.bf16.msra.mxu0 %v625
  %1000 = vmatprep.subr.bf16.mxu0 0
  %1001 = vmatpush1.bf16.msra.mxu0 %v624
  %1002 = vmatprep.subr.bf16.mxu0 0
  %1003 = vmatpush1.bf16.msra.mxu0 %v623
  %1004 = vmatprep.subr.bf16.mxu0 0
  %1005 = vmatpush1.bf16.msra.mxu0 %v622
  %1006 = vmatprep.subr.bf16.mxu0 0
  %1007 = vmatpush2.bf16.msra.mxu0 %v637
  %1008 = vmatprep.subr.bf16.mxu0 0
  %1009 = vmatpush2.bf16.msra.mxu0 %v636
  %1010 = vmatprep.subr.bf16.mxu0 0
  %1011 = vmatpush2.bf16.msra.mxu0 %v635
  %1012 = vmatprep.subr.bf16.mxu0 0
  %1013 = vmatpush2.bf16.msra.mxu0 %v634
  %1014 = vmatprep.subr.bf16.mxu0 0
  %1015 = vmatpush2.bf16.msra.mxu0 %v633
  %1016 = vmatprep.subr.bf16.mxu0 0
  %1017 = vmatpush2.bf16.msra.mxu0 %v632
  %1018 = vmatprep.subr.bf16.mxu0 0
  %1019 = vmatpush2.bf16.msra.mxu0 %v631
  %1020 = vmatprep.subr.bf16.mxu0 0
  %1021 = vmatpush2.bf16.msra.mxu0 %v630
  %1022 = vmatprep.mubr.bf16.mxu0 %v927
  %1023 = vmatmul.mubr.bf16.gmra.mxu0 %v926
  %v1024 = vpop.f32.mrf.mxu0
  %v1025 = vadd.f32 %v673, %v1024
  %v1026 = vpop.f32.mrf.mxu0
  %v1027 = vpop.f32.mrf.mxu0
  %v1028 = vadd.f32 %v678, %v1027
  %v1029 = vpop.f32.mrf.mxu0
  %1030 = vmatprep.mubr.bf16.mxu0 %v929
  %1031 = vmatmul.mubr.bf16.gmra.mxu0 %v928
  %v1032 = vpop.f32.mrf.mxu0
  %v1033 = vadd.f32 %v683, %v1032
  %v1034 = vpop.f32.mrf.mxu0
  %v1035 = vpop.f32.mrf.mxu0
  %v1036 = vadd.f32 %v688, %v1035
  %v1037 = vpop.f32.mrf.mxu0
  %1038 = vmatprep.mubr.bf16.mxu0 %v931
  %1039 = vmatmul.mubr.bf16.gmra.mxu0 %v930
  %v1040 = vpop.f32.mrf.mxu0
  %v1041 = vadd.f32 %v693, %v1040
  %v1042 = vpop.f32.mrf.mxu0
  %v1043 = vpop.f32.mrf.mxu0
  %v1044 = vadd.f32 %v698, %v1043
  %v1045 = vpop.f32.mrf.mxu0
  %1046 = vmatprep.mubr.bf16.mxu0 %v933
  %1047 = vmatmul.mubr.bf16.gmra.mxu0 %v932
  %v1048 = vpop.f32.mrf.mxu0
  %v1049 = vadd.f32 %v703, %v1048
  %v1050 = vpop.f32.mrf.mxu0
  %v1051 = vpop.f32.mrf.mxu0
  %v1052 = vadd.f32 %v708, %v1051
  %v1053 = vpop.f32.mrf.mxu0
  %1054 = vmatprep.mubr.bf16.mxu0 %v935
  %1055 = vmatmul.mubr.bf16.gmra.mxu0 %v934
  %v1056 = vpop.f32.mrf.mxu0
  %v1057 = vadd.f32 %v713, %v1056
  %v1058 = vpop.f32.mrf.mxu0
  %v1059 = vpop.f32.mrf.mxu0
  %v1060 = vadd.f32 %v718, %v1059
  %v1061 = vpop.f32.mrf.mxu0
  %1062 = vmatprep.mubr.bf16.mxu0 %v937
  %1063 = vmatmul.mubr.bf16.gmra.mxu0 %v936
  %v1064 = vpop.f32.mrf.mxu0
  %v1065 = vadd.f32 %v723, %v1064
  %v1066 = vpop.f32.mrf.mxu0
  %v1067 = vpop.f32.mrf.mxu0
  %v1068 = vadd.f32 %v728, %v1067
  %v1069 = vpop.f32.mrf.mxu0
  %1070 = vmatprep.mubr.bf16.mxu0 %v939
  %1071 = vmatmul.mubr.bf16.gmra.mxu0 %v938
  %v1072 = vpop.f32.mrf.mxu0
  %v1073 = vadd.f32 %v733, %v1072
  %v1074 = vpop.f32.mrf.mxu0
  %v1075 = vpop.f32.mrf.mxu0
  %v1076 = vadd.f32 %v738, %v1075
  %v1077 = vpop.f32.mrf.mxu0
  %1078 = vmatprep.mubr.bf16.mxu0 %v941
  %1079 = vmatmul.mubr.bf16.gmra.mxu0 %v940
  %v1080 = vpop.f32.mrf.mxu0
  %v1081 = vadd.f32 %v743, %v1080
  %v1082 = vpop.f32.mrf.mxu0
  %v1083 = vpop.f32.mrf.mxu0
  %v1084 = vadd.f32 %v748, %v1083
  %v1085 = vpop.f32.mrf.mxu0
  %1086 = vmatprep.mubr.bf16.mxu0 %v943
  %1087 = vmatmul.mubr.bf16.gmra.mxu0 %v942
  %v1088 = vpop.f32.mrf.mxu0
  %v1089 = vadd.f32 %v753, %v1088
  %v1090 = vpop.f32.mrf.mxu0
  %v1091 = vpop.f32.mrf.mxu0
  %v1092 = vadd.f32 %v758, %v1091
  %v1093 = vpop.f32.mrf.mxu0
  %1094 = vmatprep.mubr.bf16.mxu0 %v945
  %1095 = vmatmul.mubr.bf16.gmra.mxu0 %v944
  %v1096 = vpop.f32.mrf.mxu0
  %v1097 = vadd.f32 %v763, %v1096
  %v1098 = vpop.f32.mrf.mxu0
  %v1099 = vpop.f32.mrf.mxu0
  %v1100 = vadd.f32 %v768, %v1099
  %v1101 = vpop.f32.mrf.mxu0
  %1102 = vmatprep.mubr.bf16.mxu0 %v947
  %1103 = vmatmul.mubr.bf16.gmra.mxu0 %v946
  %v1104 = vpop.f32.mrf.mxu0
  %v1105 = vadd.f32 %v773, %v1104
  %v1106 = vpop.f32.mrf.mxu0
  %v1107 = vpop.f32.mrf.mxu0
  %v1108 = vadd.f32 %v778, %v1107
  %v1109 = vpop.f32.mrf.mxu0
  %1110 = vmatprep.mubr.bf16.mxu0 %v949
  %1111 = vmatmul.mubr.bf16.gmra.mxu0 %v948
  %v1112 = vpop.f32.mrf.mxu0
  %v1113 = vadd.f32 %v783, %v1112
  %v1114 = vpop.f32.mrf.mxu0
  %v1115 = vpop.f32.mrf.mxu0
  %v1116 = vadd.f32 %v788, %v1115
  %v1117 = vpop.f32.mrf.mxu0
  %1118 = vmatprep.mubr.bf16.mxu0 %v951
  %1119 = vmatmul.mubr.bf16.gmra.mxu0 %v950
  %v1120 = vpop.f32.mrf.mxu0
  %v1121 = vadd.f32 %v793, %v1120
  %v1122 = vpop.f32.mrf.mxu0
  %v1123 = vpop.f32.mrf.mxu0
  %v1124 = vadd.f32 %v798, %v1123
  %v1125 = vpop.f32.mrf.mxu0
  %1126 = vmatprep.mubr.bf16.mxu0 %v953
  %1127 = vmatmul.mubr.bf16.gmra.mxu0 %v952
  %v1128 = vpop.f32.mrf.mxu0
  %v1129 = vadd.f32 %v803, %v1128
  %v1130 = vpop.f32.mrf.mxu0
  %v1131 = vpop.f32.mrf.mxu0
  %v1132 = vadd.f32 %v808, %v1131
  %v1133 = vpop.f32.mrf.mxu0
  %1134 = vmatprep.mubr.bf16.mxu0 %v955
  %1135 = vmatmul.mubr.bf16.gmra.mxu0 %v954
  %v1136 = vpop.f32.mrf.mxu0
  %v1137 = vadd.f32 %v813, %v1136
  %v1138 = vpop.f32.mrf.mxu0
  %v1139 = vpop.f32.mrf.mxu0
  %v1140 = vadd.f32 %v818, %v1139
  %v1141 = vpop.f32.mrf.mxu0
  %1142 = vmatprep.mubr.bf16.mxu0 %v957
  %1143 = vmatmul.mubr.bf16.gmra.mxu0 %v956
  %v1144 = vpop.f32.mrf.mxu0
  %v1145 = vadd.f32 %v823, %v1144
  %v1146 = vpop.f32.mrf.mxu0
  %v1147 = vpop.f32.mrf.mxu0
  %v1148 = vadd.f32 %v828, %v1147
  %v1149 = vpop.f32.mrf.mxu0
  %1150 = vdwg.mxu0
  %v1151 = vmax.f32 %v1025, 0.0
  %v1152 = vmax.f32 %v1028, 0.0
  %v1153 = vmax.f32 %v1033, 0.0
  %v1154 = vmax.f32 %v1036, 0.0
  %v1155 = vmax.f32 %v1041, 0.0
  %v1156 = vmax.f32 %v1044, 0.0
  %v1157 = vmax.f32 %v1049, 0.0
  %v1158 = vmax.f32 %v1052, 0.0
  %v1159 = vmax.f32 %v1057, 0.0
  %v1160 = vmax.f32 %v1060, 0.0
  %v1161 = vmax.f32 %v1065, 0.0
  %v1162 = vmax.f32 %v1068, 0.0
  %v1163 = vmax.f32 %v1073, 0.0
  %v1164 = vmax.f32 %v1076, 0.0
  %v1165 = vmax.f32 %v1081, 0.0
  %v1166 = vmax.f32 %v1084, 0.0
  %v1167 = vmax.f32 %v1089, 0.0
  %v1168 = vmax.f32 %v1092, 0.0
  %v1169 = vmax.f32 %v1097, 0.0
  %v1170 = vmax.f32 %v1100, 0.0
  %v1171 = vmax.f32 %v1105, 0.0
  %v1172 = vmax.f32 %v1108, 0.0
  %v1173 = vmax.f32 %v1113, 0.0
  %v1174 = vmax.f32 %v1116, 0.0
  %v1175 = vmax.f32 %v1121, 0.0
  %v1176 = vmax.f32 %v1124, 0.0
  %v1177 = vmax.f32 %v1129, 0.0
  %v1178 = vmax.f32 %v1132, 0.0
  %v1179 = vmax.f32 %v1137, 0.0
  %v1180 = vmax.f32 %v1140, 0.0
  %v1181 = vmax.f32 %v1145, 0.0
  %v1182 = vmax.f32 %v1148, 0.0
  %v1183 = vld [vmem:[%s5] sm:$0xff]
  %v1184 = vld [vmem:[%s5 + $0x8] sm:$0xff]
  %v1185 = vld [vmem:[%s5 + $0x10] sm:$0xff]
  %v1186 = vld [vmem:[%s5 + $0x18] sm:$0xff]
  %v1187 = vld [vmem:[%s5 + $0x20] sm:$0xff]
  %v1188 = vld [vmem:[%s5 + $0x28] sm:$0xff]
  %v1189 = vld [vmem:[%s5 + $0x30] sm:$0xff]
  %v1190 = vld [vmem:[%s5 + $0x38] sm:$0xff]
  %v1191 = vld [vmem:[%s5 + $0x40] sm:$0xff]
  %v1192 = vld [vmem:[%s5 + $0x48] sm:$0xff]
  %v1193 = vld [vmem:[%s5 + $0x50] sm:$0xff]
  %v1194 = vld [vmem:[%s5 + $0x58] sm:$0xff]
  %v1195 = vld [vmem:[%s5 + $0x60] sm:$0xff]
  %v1196 = vld [vmem:[%s5 + $0x68] sm:$0xff]
  %v1197 = vld [vmem:[%s5 + $0x70] sm:$0xff]
  %v1198 = vld [vmem:[%s5 + $0x78] sm:$0xff]
  %v1199 = vld [vmem:[%s5 + $0x80] sm:$0xff]
  %v1200 = vld [vmem:[%s5 + $0x88] sm:$0xff]
  %v1201 = vld [vmem:[%s5 + $0x90] sm:$0xff]
  %v1202 = vld [vmem:[%s5 + $0x98] sm:$0xff]
  %v1203 = vld [vmem:[%s5 + $0xa0] sm:$0xff]
  %v1204 = vld [vmem:[%s5 + $0xa8] sm:$0xff]
  %v1205 = vld [vmem:[%s5 + $0xb0] sm:$0xff]
  %v1206 = vld [vmem:[%s5 + $0xb8] sm:$0xff]
  %v1207 = vld [vmem:[%s5 + $0xc0] sm:$0xff]
  %v1208 = vld [vmem:[%s5 + $0xc8] sm:$0xff]
  %v1209 = vld [vmem:[%s5 + $0xd0] sm:$0xff]
  %v1210 = vld [vmem:[%s5 + $0xd8] sm:$0xff]
  %v1211 = vld [vmem:[%s5 + $0xe0] sm:$0xff]
  %v1212 = vld [vmem:[%s5 + $0xe8] sm:$0xff]
  %v1213 = vld [vmem:[%s5 + $0xf0] sm:$0xff]
  %v1214 = vld [vmem:[%s5 + $0xf8] sm:$0xff]
  %1216 = vset.pattern.permute.xlu0 0
  %1217 = vperm.xlu0 %1216, %v1183
  %v1218 = vpop.permute.xlu0 %1217
  %1221 = vset.pattern.permute.xlu0 0
  %1222 = vperm.xlu0 %1221, %v1184
  %v1223 = vpop.permute.xlu0 %1222
  %1226 = vset.pattern.permute.xlu0 0
  %1227 = vperm.xlu0 %1226, %v1185
  %v1228 = vpop.permute.xlu0 %1227
  %1231 = vset.pattern.permute.xlu0 0
  %1232 = vperm.xlu0 %1231, %v1186
  %v1233 = vpop.permute.xlu0 %1232
  %1236 = vset.pattern.permute.xlu0 0
  %1237 = vperm.xlu0 %1236, %v1187
  %v1238 = vpop.permute.xlu0 %1237
  %1241 = vset.pattern.permute.xlu0 0
  %1242 = vperm.xlu0 %1241, %v1188
  %v1243 = vpop.permute.xlu0 %1242
  %1246 = vset.pattern.permute.xlu0 0
  %1247 = vperm.xlu0 %1246, %v1189
  %v1248 = vpop.permute.xlu0 %1247
  %1251 = vset.pattern.permute.xlu0 0
  %1252 = vperm.xlu0 %1251, %v1190
  %v1253 = vpop.permute.xlu0 %1252
  %1256 = vset.pattern.permute.xlu0 0
  %1257 = vperm.xlu0 %1256, %v1191
  %v1258 = vpop.permute.xlu0 %1257
  %1261 = vset.pattern.permute.xlu0 0
  %1262 = vperm.xlu0 %1261, %v1192
  %v1263 = vpop.permute.xlu0 %1262
  %1266 = vset.pattern.permute.xlu0 0
  %1267 = vperm.xlu0 %1266, %v1193
  %v1268 = vpop.permute.xlu0 %1267
  %1271 = vset.pattern.permute.xlu0 0
  %1272 = vperm.xlu0 %1271, %v1194
  %v1273 = vpop.permute.xlu0 %1272
  %1276 = vset.pattern.permute.xlu0 0
  %1277 = vperm.xlu0 %1276, %v1195
  %v1278 = vpop.permute.xlu0 %1277
  %1281 = vset.pattern.permute.xlu0 0
  %1282 = vperm.xlu0 %1281, %v1196
  %v1283 = vpop.permute.xlu0 %1282
  %1286 = vset.pattern.permute.xlu0 0
  %1287 = vperm.xlu0 %1286, %v1197
  %v1288 = vpop.permute.xlu0 %1287
  %1291 = vset.pattern.permute.xlu0 0
  %1292 = vperm.xlu0 %1291, %v1198
  %v1293 = vpop.permute.xlu0 %1292
  %1296 = vset.pattern.permute.xlu0 0
  %1297 = vperm.xlu0 %1296, %v1199
  %v1298 = vpop.permute.xlu0 %1297
  %1301 = vset.pattern.permute.xlu0 0
  %1302 = vperm.xlu0 %1301, %v1200
  %v1303 = vpop.permute.xlu0 %1302
  %1306 = vset.pattern.permute.xlu0 0
  %1307 = vperm.xlu0 %1306, %v1201
  %v1308 = vpop.permute.xlu0 %1307
  %1311 = vset.pattern.permute.xlu0 0
  %1312 = vperm.xlu0 %1311, %v1202
  %v1313 = vpop.permute.xlu0 %1312
  %1316 = vset.pattern.permute.xlu0 0
  %1317 = vperm.xlu0 %1316, %v1203
  %v1318 = vpop.permute.xlu0 %1317
  %1321 = vset.pattern.permute.xlu0 0
  %1322 = vperm.xlu0 %1321, %v1204
  %v1323 = vpop.permute.xlu0 %1322
  %1326 = vset.pattern.permute.xlu0 0
  %1327 = vperm.xlu0 %1326, %v1205
  %v1328 = vpop.permute.xlu0 %1327
  %1331 = vset.pattern.permute.xlu0 0
  %1332 = vperm.xlu0 %1331, %v1206
  %v1333 = vpop.permute.xlu0 %1332
  %1336 = vset.pattern.permute.xlu0 0
  %1337 = vperm.xlu0 %1336, %v1207
  %v1338 = vpop.permute.xlu0 %1337
  %1341 = vset.pattern.permute.xlu0 0
  %1342 = vperm.xlu0 %1341, %v1208
  %v1343 = vpop.permute.xlu0 %1342
  %1346 = vset.pattern.permute.xlu0 0
  %1347 = vperm.xlu0 %1346, %v1209
  %v1348 = vpop.permute.xlu0 %1347
  %1351 = vset.pattern.permute.xlu0 0
  %1352 = vperm.xlu0 %1351, %v1210
  %v1353 = vpop.permute.xlu0 %1352
  %1356 = vset.pattern.permute.xlu0 0
  %1357 = vperm.xlu0 %1356, %v1211
  %v1358 = vpop.permute.xlu0 %1357
  %1361 = vset.pattern.permute.xlu0 0
  %1362 = vperm.xlu0 %1361, %v1212
  %v1363 = vpop.permute.xlu0 %1362
  %1366 = vset.pattern.permute.xlu0 0
  %1367 = vperm.xlu0 %1366, %v1213
  %v1368 = vpop.permute.xlu0 %1367
  %1371 = vset.pattern.permute.xlu0 0
  %1372 = vperm.xlu0 %1371, %v1214
  %v1373 = vpop.permute.xlu0 %1372
  %v1375 = vmul.f32 %v1151, %v1218
  %v1376 = vmul.f32 %v1152, %v1223
  %v1377 = vmul.f32 %v1153, %v1228
  %v1378 = vmul.f32 %v1154, %v1233
  %v1379 = vmul.f32 %v1155, %v1238
  %v1380 = vmul.f32 %v1156, %v1243
  %v1381 = vmul.f32 %v1157, %v1248
  %v1382 = vmul.f32 %v1158, %v1253
  %v1383 = vmul.f32 %v1159, %v1258
  %v1384 = vmul.f32 %v1160, %v1263
  %v1385 = vmul.f32 %v1161, %v1268
  %v1386 = vmul.f32 %v1162, %v1273
  %v1387 = vmul.f32 %v1163, %v1278
  %v1388 = vmul.f32 %v1164, %v1283
  %v1389 = vmul.f32 %v1165, %v1288
  %v1390 = vmul.f32 %v1166, %v1293
  %v1391 = vmul.f32 %v1167, %v1298
  %v1392 = vmul.f32 %v1168, %v1303
  %v1393 = vmul.f32 %v1169, %v1308
  %v1394 = vmul.f32 %v1170, %v1313
  %v1395 = vmul.f32 %v1171, %v1318
  %v1396 = vmul.f32 %v1172, %v1323
  %v1397 = vmul.f32 %v1173, %v1328
  %v1398 = vmul.f32 %v1174, %v1333
  %v1399 = vmul.f32 %v1175, %v1338
  %v1400 = vmul.f32 %v1176, %v1343
  %v1401 = vmul.f32 %v1177, %v1348
  %v1402 = vmul.f32 %v1178, %v1353
  %v1403 = vmul.f32 %v1179, %v1358
  %v1404 = vmul.f32 %v1180, %v1363
  %v1405 = vmul.f32 %v1181, %v1368
  %v1406 = vmul.f32 %v1182, %v1373
  %v1407 = vadd.f32 %v1375, %v1376
  %v1408 = vadd.f32 %v1407, %v1377
  %v1409 = vadd.f32 %v1408, %v1378
  %v1410 = vadd.f32 %v1409, %v1379
  %v1411 = vadd.f32 %v1410, %v1380
  %v1412 = vadd.f32 %v1411, %v1381
  %v1413 = vadd.f32 %v1412, %v1382
  %v1414 = vadd.f32 %v1413, %v1383
  %v1415 = vadd.f32 %v1414, %v1384
  %v1416 = vadd.f32 %v1415, %v1385
  %v1417 = vadd.f32 %v1416, %v1386
  %v1418 = vadd.f32 %v1417, %v1387
  %v1419 = vadd.f32 %v1418, %v1388
  %v1420 = vadd.f32 %v1419, %v1389
  %v1421 = vadd.f32 %v1420, %v1390
  %v1422 = vadd.f32 %v1421, %v1391
  %v1423 = vadd.f32 %v1422, %v1392
  %v1424 = vadd.f32 %v1423, %v1393
  %v1425 = vadd.f32 %v1424, %v1394
  %v1426 = vadd.f32 %v1425, %v1395
  %v1427 = vadd.f32 %v1426, %v1396
  %v1428 = vadd.f32 %v1427, %v1397
  %v1429 = vadd.f32 %v1428, %v1398
  %v1430 = vadd.f32 %v1429, %v1399
  %v1431 = vadd.f32 %v1430, %v1400
  %v1432 = vadd.f32 %v1431, %v1401
  %v1433 = vadd.f32 %v1432, %v1402
  %v1434 = vadd.f32 %v1433, %v1403
  %v1435 = vadd.f32 %v1434, %v1404
  %v1436 = vadd.f32 %v1435, %v1405
  %v1437 = vadd.f32 %v1436, %v1406
  %v1438 = vrot.slane %v1437, 4
  %v1439 = vadd.f32 %v1437, %v1438
  %v1440 = vrot.slane %v1439, 2
  %v1441 = vadd.f32 %v1439, %v1440
  %v1442 = vrot.slane %v1441, 1
  %v1443 = vadd.f32 %v1441, %v1442
  %s1444 = sld [smem:[#allocation2]]
  %v1445 = vstv %s1444
  %v1446 = vadd.f32 %v1443, %v1445
  %v1447 = vxor.u32 %v1446, 2147483648
  %v1448 = vmul.f32 %v1447, 1.442695
  %v1449 = vpow.pop %v1448
  %v1450 = vadd.f32 %v1449, 1.0
  %v1451 = vrcp.pop %v1450
  %v1452 = vmul.f32 1.0, %v1451
  %1453 = vst [vmem:[%s7] sm:$0x1] %v1452
  // Predicated region
  $region30: #{net_forward.1} parent=0 // pred_check
    _
  $region31: #{net_forward.1} parent=0 // pred_check_branch
    %1455 = sbr.rel (0) target = $region33
  $region32: #{net_forward.1} parent=0 // pred_region
    _
  $region33: #{net_forward.1} parent=0 // pred_fallthru
    _
  // Predicated region
  $region34: #{net_forward.1} parent=0 // pred_check
    _
  $region35: #{net_forward.1} parent=0 // pred_check_branch
    %1457 = sbr.rel (0) target = $region37
  $region36: #{net_forward.1} parent=0 // pred_region
    _
  $region37: #{net_forward.1} parent=0 // pred_fallthru
    _

</llo_original>
